<compile_context>
chip_gen: v7x
topology: tpu7x:2x2x1
jax: 0.10.0
libtpu: 0.0.40
codegen_flags: <defaults>
</compile_context>

<pallas_src>
import math
import jax
import jax.numpy as jnp
from jax import lax
from jax.experimental import pallas as pl
from jax.experimental.pallas import tpu as pltpu


def _level_params(h, w, k):
    """Static per-level pooling parameters (mirrors the PyTorch module)."""
    levels = []
    off = 0
    for (lh, lw) in k:
        kh = math.ceil(h / lh)
        kw = math.ceil(w / lw)
        ph = math.floor((kh * lh - h + 1) / 2)
        pw = math.floor((kw * lw - w + 1) / 2)
        # Same constraint nn.MaxPool2d enforces ("pad <= kernel/2"); it also
        # guarantees every clamped window is non-empty and the output grid is
        # exactly (lh, lw), so no window ever reduces over padding only.
        assert 2 * ph <= kh and 2 * pw <= kw, (
            f"padding {(ph, pw)} larger than half of kernel {(kh, kw)}")
        levels.append(dict(h=h, w=w, lh=lh, lw=lw, kh=kh, kw=kw,
                           ph=ph, pw=pw, off=off))
        off += lh * lw
        h, w = lh, lw
    return levels, off            # off == total pooled positions


def _make_fused_kernel(levels):
    """Kernel computing every pyramid level for one (batch, channel) block."""

    def kernel(x_ref, o_ref):
        # x_ref: (1, c_t, H, W)   NCHW block (level-1 source)
        # o_ref: (1, total, c_t)  all levels, spatial (h*w) flattened on dim 1
        for li, lv in enumerate(levels):
            h, w = lv["h"], lv["w"]
            lh, lw, kh, kw = lv["lh"], lv["lw"], lv["kh"], lv["kw"]
            ph, pw, off = lv["ph"], lv["pw"], lv["off"]
            prev_off = levels[li - 1]["off"] if li > 0 else 0

            for oh in range(lh):
                r0 = max(0, oh * kh - ph)
                r1 = min(h, (oh + 1) * kh - ph)
                for ow in range(lw):
                    c0 = max(0, ow * kw - pw)
                    c1 = min(w, (ow + 1) * kw - pw)
                    if li == 0:
                        # Window straight from the HBM-streamed input block.
                        win = x_ref[:, :, r0:r1, c0:c1]          # (1, c_t, nr, nc)
                        m = jnp.max(jnp.max(win, axis=3), axis=2)  # (1, c_t)
                    else:
                        # Previous level's pooled slab, already in the output
                        # block in VMEM, flattened row-major over (h, w).
                        m = None
                        for r in range(r0, r1):
                            base = prev_off + r * w
                            seg = o_ref[:, base + c0:base + c1, :]  # (1, nc, c_t)
                            pm = jnp.max(seg, axis=1)               # (1, c_t)
                            m = pm if m is None else jnp.maximum(m, pm)
                    idx = off + oh * lw + ow
                    o_ref[:, idx:idx + 1, :] = m[:, None, :]

    return kernel


def _pick_c_tile(c, h, w, itemsize):
    """Channel tile: full C, or a multiple of 128 dividing C (output-lane rule),
    sized so the input block stays comfortably inside scoped VMEM."""
    budget = 8 * 1024 * 1024
    if c * h * w * itemsize <= budget:
        return c
    best = None
    for c_t in (512, 256, 128):
        if c % c_t == 0:
            best = c_t
            if c_t * h * w * itemsize <= budget:
                return c_t
    return best if best is not None else c


def iter_pool(x_nchw, k):
    """JAX/Pallas equivalent of Pool(k).forward(x). x_nchw: (N, C, H, W)."""
    num, c, h, w = x_nchw.shape
    levels, total = _level_params(h, w, k)
    itemsize = jnp.dtype(x_nchw.dtype).itemsize
    c_t = _pick_c_tile(c, h, w, itemsize)
    grid = (num, c // c_t)

    in_block = c_t * h * w * itemsize
    out_block = total * c_t * itemsize
    vmem_limit = int(min(max(4 * (in_block + out_block) + (2 << 20), 32 << 20),
                         64 << 20))
    flops = num * c * sum(lv["h"] * lv["w"] for lv in levels)  # ~1 cmp / element
    bytes_accessed = (num * c * h * w + num * c * total) * itemsize

    y = pl.pallas_call(
        _make_fused_kernel(levels),
        out_shape=jax.ShapeDtypeStruct((num, total, c), x_nchw.dtype),
        grid=grid,
        in_specs=[pl.BlockSpec((1, c_t, h, w), lambda i, j: (i, j, 0, 0))],
        out_specs=pl.BlockSpec((1, total, c_t), lambda i, j: (i, 0, j)),
        compiler_params=pltpu.CompilerParams(
            dimension_semantics=("parallel", "parallel"),
            vmem_limit_bytes=vmem_limit),
        cost_estimate=pl.CostEstimate(flops=flops, transcendentals=0,
                                      bytes_accessed=bytes_accessed),
    )(x_nchw)
    # Only the tiny pooled result changes layout: (num, total, c) -> (num, c, total).
    return jnp.transpose(y, (0, 2, 1))


def _reference_iter_pool(x_nchw, k):
    """Pure-JAX reference (lax.reduce_window) mirroring nn.MaxPool2d semantics."""
    num, c, h, w = x_nchw.shape
    x = x_nchw
    outs = []
    for (lh, lw) in k:
        kh = math.ceil(h / lh)
        kw = math.ceil(w / lw)
        ph = math.floor((kh * lh - h + 1) / 2)
        pw = math.floor((kw * lw - w + 1) / 2)
        x = lax.reduce_window(x, -jnp.inf, lax.max,
                              window_dimensions=(1, 1, kh, kw),
                              window_strides=(1, 1, kh, kw),
                              padding=((0, 0), (0, 0), (ph, ph), (pw, pw)))
        outs.append(x.reshape(num, c, -1))
        h, w = lh, lw
    return jnp.concatenate(outs, axis=-1)


if __name__ == "__main__":
    key = jax.random.PRNGKey(0)
    x = jax.random.normal(key, (2, 4, 16, 16), dtype=jnp.float32)
    # pyramid levels (level_h, level_w); (3,3) exercises the boundary-window path
    k = [(3, 3), (2, 2), (1, 1)]

    run = jax.jit(lambda t: iter_pool(t, k))
    out = jax.block_until_ready(run(x))
    ref = jax.block_until_ready(_reference_iter_pool(x, k))

    assert out.shape == (2, 4, 3 * 3 + 2 * 2 + 1 * 1), out.shape
    assert jnp.allclose(out, ref, atol=1e-6, rtol=1e-6), "mismatch vs reference"
    print("KERNEL_OK")
</pallas_src>

<mosaic_0001>
module attributes {stable_mosaic.version = 11 : i64} {
  func.func @kernel(%arg0: i32, %arg1: i32, %arg2: memref<1x4x16x16xf32, #tpu.memory_space<vmem>>, %arg3: memref<1x14x4xf32, #tpu.memory_space<vmem>>) attributes {dimension_semantics = [#tpu.dimension_semantics<parallel>, #tpu.dimension_semantics<parallel>], iteration_bounds = array<i64: 2, 1>, scalar_prefetch = 0 : i64, scratch_operands = 0 : i64, tpu.core_type = #tpu.core_type<tc>, window_params = [{transform_indices = @transform_0, window_bounds = array<i64: 1, 4, 16, 16>}, {transform_indices = @transform_1, window_bounds = array<i64: 1, 14, 4>}]} {
    %c0 = arith.constant 0 : index
    %c0_0 = arith.constant 0 : index
    %c0_1 = arith.constant 0 : index
    %c0_2 = arith.constant 0 : index
    %0 = vector.load %arg2[%c0, %c0_0, %c0_1, %c0_2] : memref<1x4x16x16xf32, #tpu.memory_space<vmem>>, vector<1x4x5x5xf32>
    %cst = arith.constant dense<0xFF800000> : vector<1x4x5xf32>
    %1 = vector.multi_reduction <maximumf>, %0, %cst [3] : vector<1x4x5x5xf32> to vector<1x4x5xf32>
    %cst_3 = arith.constant dense<0xFF800000> : vector<1x4xf32>
    %2 = vector.multi_reduction <maximumf>, %1, %cst_3 [2] : vector<1x4x5xf32> to vector<1x4xf32>
    %3 = vector.shape_cast %2 : vector<1x4xf32> to vector<1x1x4xf32>
    %c0_4 = arith.constant 0 : index
    %c0_5 = arith.constant 0 : index
    %c0_6 = arith.constant 0 : index
    %4 = vector.load %arg3[%c0_4, %c0_5, %c0_6] : memref<1x14x4xf32, #tpu.memory_space<vmem>>, vector<1x1x4xf32>
    tpu.vector_store %arg3[%c0_4, %c0_5, %c0_6], %3 {strides = array<i32>} : memref<1x14x4xf32, #tpu.memory_space<vmem>>, vector<1x1x4xf32>,
    %c0_7 = arith.constant 0 : index
    %c0_8 = arith.constant 0 : index
    %c0_9 = arith.constant 0 : index
    %c5 = arith.constant 5 : index
    %5 = vector.load %arg2[%c0_7, %c0_8, %c0_9, %c5] : memref<1x4x16x16xf32, #tpu.memory_space<vmem>>, vector<1x4x5x6xf32>
    %cst_10 = arith.constant dense<0xFF800000> : vector<1x4x5xf32>
    %6 = vector.multi_reduction <maximumf>, %5, %cst_10 [3] : vector<1x4x5x6xf32> to vector<1x4x5xf32>
    %cst_11 = arith.constant dense<0xFF800000> : vector<1x4xf32>
    %7 = vector.multi_reduction <maximumf>, %6, %cst_11 [2] : vector<1x4x5xf32> to vector<1x4xf32>
    %8 = vector.shape_cast %7 : vector<1x4xf32> to vector<1x1x4xf32>
    %c0_12 = arith.constant 0 : index
    %c1 = arith.constant 1 : index
    %c0_13 = arith.constant 0 : index
    %9 = vector.load %arg3[%c0_12, %c1, %c0_13] : memref<1x14x4xf32, #tpu.memory_space<vmem>>, vector<1x1x4xf32>
    tpu.vector_store %arg3[%c0_12, %c1, %c0_13], %8 {strides = array<i32>} : memref<1x14x4xf32, #tpu.memory_space<vmem>>, vector<1x1x4xf32>,
    %c0_14 = arith.constant 0 : index
    %c0_15 = arith.constant 0 : index
    %c0_16 = arith.constant 0 : index
    %c11 = arith.constant 11 : index
    %10 = vector.load %arg2[%c0_14, %c0_15, %c0_16, %c11] : memref<1x4x16x16xf32, #tpu.memory_space<vmem>>, vector<1x4x5x5xf32>
    %cst_17 = arith.constant dense<0xFF800000> : vector<1x4x5xf32>
    %11 = vector.multi_reduction <maximumf>, %10, %cst_17 [3] : vector<1x4x5x5xf32> to vector<1x4x5xf32>
    %cst_18 = arith.constant dense<0xFF800000> : vector<1x4xf32>
    %12 = vector.multi_reduction <maximumf>, %11, %cst_18 [2] : vector<1x4x5xf32> to vector<1x4xf32>
    %13 = vector.shape_cast %12 : vector<1x4xf32> to vector<1x1x4xf32>
    %c0_19 = arith.constant 0 : index
    %c2 = arith.constant 2 : index
    %c0_20 = arith.constant 0 : index
    %14 = vector.load %arg3[%c0_19, %c2, %c0_20] : memref<1x14x4xf32, #tpu.memory_space<vmem>>, vector<1x1x4xf32>
    tpu.vector_store %arg3[%c0_19, %c2, %c0_20], %13 {strides = array<i32>} : memref<1x14x4xf32, #tpu.memory_space<vmem>>, vector<1x1x4xf32>,
    %c0_21 = arith.constant 0 : index
    %c0_22 = arith.constant 0 : index
    %c5_23 = arith.constant 5 : index
    %c0_24 = arith.constant 0 : index
    %15 = vector.load %arg2[%c0_21, %c0_22, %c5_23, %c0_24] : memref<1x4x16x16xf32, #tpu.memory_space<vmem>>, vector<1x4x6x5xf32>
    %cst_25 = arith.constant dense<0xFF800000> : vector<1x4x6xf32>
    %16 = vector.multi_reduction <maximumf>, %15, %cst_25 [3] : vector<1x4x6x5xf32> to vector<1x4x6xf32>
    %cst_26 = arith.constant dense<0xFF800000> : vector<1x4xf32>
    %17 = vector.multi_reduction <maximumf>, %16, %cst_26 [2] : vector<1x4x6xf32> to vector<1x4xf32>
    %18 = vector.shape_cast %17 : vector<1x4xf32> to vector<1x1x4xf32>
    %c0_27 = arith.constant 0 : index
    %c3 = arith.constant 3 : index
    %c0_28 = arith.constant 0 : index
    %19 = vector.load %arg3[%c0_27, %c3, %c0_28] : memref<1x14x4xf32, #tpu.memory_space<vmem>>, vector<1x1x4xf32>
    tpu.vector_store %arg3[%c0_27, %c3, %c0_28], %18 {strides = array<i32>} : memref<1x14x4xf32, #tpu.memory_space<vmem>>, vector<1x1x4xf32>,
    %c0_29 = arith.constant 0 : index
    %c0_30 = arith.constant 0 : index
    %c5_31 = arith.constant 5 : index
    %c5_32 = arith.constant 5 : index
    %20 = vector.load %arg2[%c0_29, %c0_30, %c5_31, %c5_32] : memref<1x4x16x16xf32, #tpu.memory_space<vmem>>, vector<1x4x6x6xf32>
    %cst_33 = arith.constant dense<0xFF800000> : vector<1x4x6xf32>
    %21 = vector.multi_reduction <maximumf>, %20, %cst_33 [3] : vector<1x4x6x6xf32> to vector<1x4x6xf32>
    %cst_34 = arith.constant dense<0xFF800000> : vector<1x4xf32>
    %22 = vector.multi_reduction <maximumf>, %21, %cst_34 [2] : vector<1x4x6xf32> to vector<1x4xf32>
    %23 = vector.shape_cast %22 : vector<1x4xf32> to vector<1x1x4xf32>
    %c0_35 = arith.constant 0 : index
    %c4 = arith.constant 4 : index
    %c0_36 = arith.constant 0 : index
    %24 = vector.load %arg3[%c0_35, %c4, %c0_36] : memref<1x14x4xf32, #tpu.memory_space<vmem>>, vector<1x1x4xf32>
    tpu.vector_store %arg3[%c0_35, %c4, %c0_36], %23 {strides = array<i32>} : memref<1x14x4xf32, #tpu.memory_space<vmem>>, vector<1x1x4xf32>,
    %c0_37 = arith.constant 0 : index
    %c0_38 = arith.constant 0 : index
    %c5_39 = arith.constant 5 : index
    %c11_40 = arith.constant 11 : index
    %25 = vector.load %arg2[%c0_37, %c0_38, %c5_39, %c11_40] : memref<1x4x16x16xf32, #tpu.memory_space<vmem>>, vector<1x4x6x5xf32>
    %cst_41 = arith.constant dense<0xFF800000> : vector<1x4x6xf32>
    %26 = vector.multi_reduction <maximumf>, %25, %cst_41 [3] : vector<1x4x6x5xf32> to vector<1x4x6xf32>
    %cst_42 = arith.constant dense<0xFF800000> : vector<1x4xf32>
    %27 = vector.multi_reduction <maximumf>, %26, %cst_42 [2] : vector<1x4x6xf32> to vector<1x4xf32>
    %28 = vector.shape_cast %27 : vector<1x4xf32> to vector<1x1x4xf32>
    %c0_43 = arith.constant 0 : index
    %c5_44 = arith.constant 5 : index
    %c0_45 = arith.constant 0 : index
    %29 = vector.load %arg3[%c0_43, %c5_44, %c0_45] : memref<1x14x4xf32, #tpu.memory_space<vmem>>, vector<1x1x4xf32>
    tpu.vector_store %arg3[%c0_43, %c5_44, %c0_45], %28 {strides = array<i32>} : memref<1x14x4xf32, #tpu.memory_space<vmem>>, vector<1x1x4xf32>,
    %c0_46 = arith.constant 0 : index
    %c0_47 = arith.constant 0 : index
    %c11_48 = arith.constant 11 : index
    %c0_49 = arith.constant 0 : index
    %30 = vector.load %arg2[%c0_46, %c0_47, %c11_48, %c0_49] : memref<1x4x16x16xf32, #tpu.memory_space<vmem>>, vector<1x4x5x5xf32>
    %cst_50 = arith.constant dense<0xFF800000> : vector<1x4x5xf32>
    %31 = vector.multi_reduction <maximumf>, %30, %cst_50 [3] : vector<1x4x5x5xf32> to vector<1x4x5xf32>
    %cst_51 = arith.constant dense<0xFF800000> : vector<1x4xf32>
    %32 = vector.multi_reduction <maximumf>, %31, %cst_51 [2] : vector<1x4x5xf32> to vector<1x4xf32>
    %33 = vector.shape_cast %32 : vector<1x4xf32> to vector<1x1x4xf32>
    %c0_52 = arith.constant 0 : index
    %c6 = arith.constant 6 : index
    %c0_53 = arith.constant 0 : index
    %34 = vector.load %arg3[%c0_52, %c6, %c0_53] : memref<1x14x4xf32, #tpu.memory_space<vmem>>, vector<1x1x4xf32>
    tpu.vector_store %arg3[%c0_52, %c6, %c0_53], %33 {strides = array<i32>} : memref<1x14x4xf32, #tpu.memory_space<vmem>>, vector<1x1x4xf32>,
    %c0_54 = arith.constant 0 : index
    %c0_55 = arith.constant 0 : index
    %c11_56 = arith.constant 11 : index
    %c5_57 = arith.constant 5 : index
    %35 = vector.load %arg2[%c0_54, %c0_55, %c11_56, %c5_57] : memref<1x4x16x16xf32, #tpu.memory_space<vmem>>, vector<1x4x5x6xf32>
    %cst_58 = arith.constant dense<0xFF800000> : vector<1x4x5xf32>
    %36 = vector.multi_reduction <maximumf>, %35, %cst_58 [3] : vector<1x4x5x6xf32> to vector<1x4x5xf32>
    %cst_59 = arith.constant dense<0xFF800000> : vector<1x4xf32>
    %37 = vector.multi_reduction <maximumf>, %36, %cst_59 [2] : vector<1x4x5xf32> to vector<1x4xf32>
    %38 = vector.shape_cast %37 : vector<1x4xf32> to vector<1x1x4xf32>
    %c0_60 = arith.constant 0 : index
    %c7 = arith.constant 7 : index
    %c0_61 = arith.constant 0 : index
    %39 = vector.load %arg3[%c0_60, %c7, %c0_61] : memref<1x14x4xf32, #tpu.memory_space<vmem>>, vector<1x1x4xf32>
    tpu.vector_store %arg3[%c0_60, %c7, %c0_61], %38 {strides = array<i32>} : memref<1x14x4xf32, #tpu.memory_space<vmem>>, vector<1x1x4xf32>,
    %c0_62 = arith.constant 0 : index
    %c0_63 = arith.constant 0 : index
    %c11_64 = arith.constant 11 : index
    %c11_65 = arith.constant 11 : index
    %40 = vector.load %arg2[%c0_62, %c0_63, %c11_64, %c11_65] : memref<1x4x16x16xf32, #tpu.memory_space<vmem>>, vector<1x4x5x5xf32>
    %cst_66 = arith.constant dense<0xFF800000> : vector<1x4x5xf32>
    %41 = vector.multi_reduction <maximumf>, %40, %cst_66 [3] : vector<1x4x5x5xf32> to vector<1x4x5xf32>
    %cst_67 = arith.constant dense<0xFF800000> : vector<1x4xf32>
    %42 = vector.multi_reduction <maximumf>, %41, %cst_67 [2] : vector<1x4x5xf32> to vector<1x4xf32>
    %43 = vector.shape_cast %42 : vector<1x4xf32> to vector<1x1x4xf32>
    %c0_68 = arith.constant 0 : index
    %c8 = arith.constant 8 : index
    %c0_69 = arith.constant 0 : index
    %44 = vector.load %arg3[%c0_68, %c8, %c0_69] : memref<1x14x4xf32, #tpu.memory_space<vmem>>, vector<1x1x4xf32>
    tpu.vector_store %arg3[%c0_68, %c8, %c0_69], %43 {strides = array<i32>} : memref<1x14x4xf32, #tpu.memory_space<vmem>>, vector<1x1x4xf32>,
    %c0_70 = arith.constant 0 : index
    %c0_71 = arith.constant 0 : index
    %c0_72 = arith.constant 0 : index
    %45 = vector.load %arg3[%c0_70, %c0_71, %c0_72] : memref<1x14x4xf32, #tpu.memory_space<vmem>>, vector<1x1x4xf32>
    %cst_73 = arith.constant dense<0xFF800000> : vector<1x4xf32>
    %46 = vector.multi_reduction <maximumf>, %45, %cst_73 [1] : vector<1x1x4xf32> to vector<1x4xf32>
    %47 = vector.shape_cast %46 : vector<1x4xf32> to vector<1x1x4xf32>
    %c0_74 = arith.constant 0 : index
    %c9 = arith.constant 9 : index
    %c0_75 = arith.constant 0 : index
    %48 = vector.load %arg3[%c0_74, %c9, %c0_75] : memref<1x14x4xf32, #tpu.memory_space<vmem>>, vector<1x1x4xf32>
    tpu.vector_store %arg3[%c0_74, %c9, %c0_75], %47 {strides = array<i32>} : memref<1x14x4xf32, #tpu.memory_space<vmem>>, vector<1x1x4xf32>,
    %c0_76 = arith.constant 0 : index
    %c1_77 = arith.constant 1 : index
    %c0_78 = arith.constant 0 : index
    %49 = vector.load %arg3[%c0_76, %c1_77, %c0_78] : memref<1x14x4xf32, #tpu.memory_space<vmem>>, vector<1x2x4xf32>
    %cst_79 = arith.constant dense<0xFF800000> : vector<1x4xf32>
    %50 = vector.multi_reduction <maximumf>, %49, %cst_79 [1] : vector<1x2x4xf32> to vector<1x4xf32>
    %51 = vector.shape_cast %50 : vector<1x4xf32> to vector<1x1x4xf32>
    %c0_80 = arith.constant 0 : index
    %c10 = arith.constant 10 : index
    %c0_81 = arith.constant 0 : index
    %52 = vector.load %arg3[%c0_80, %c10, %c0_81] : memref<1x14x4xf32, #tpu.memory_space<vmem>>, vector<1x1x4xf32>
    tpu.vector_store %arg3[%c0_80, %c10, %c0_81], %51 {strides = array<i32>} : memref<1x14x4xf32, #tpu.memory_space<vmem>>, vector<1x1x4xf32>,
    %c0_82 = arith.constant 0 : index
    %c3_83 = arith.constant 3 : index
    %c0_84 = arith.constant 0 : index
    %53 = vector.load %arg3[%c0_82, %c3_83, %c0_84] : memref<1x14x4xf32, #tpu.memory_space<vmem>>, vector<1x1x4xf32>
    %cst_85 = arith.constant dense<0xFF800000> : vector<1x4xf32>
    %54 = vector.multi_reduction <maximumf>, %53, %cst_85 [1] : vector<1x1x4xf32> to vector<1x4xf32>
    %c0_86 = arith.constant 0 : index
    %c6_87 = arith.constant 6 : index
    %c0_88 = arith.constant 0 : index
    %55 = vector.load %arg3[%c0_86, %c6_87, %c0_88] : memref<1x14x4xf32, #tpu.memory_space<vmem>>, vector<1x1x4xf32>
    %cst_89 = arith.constant dense<0xFF800000> : vector<1x4xf32>
    %56 = vector.multi_reduction <maximumf>, %55, %cst_89 [1] : vector<1x1x4xf32> to vector<1x4xf32>
    %57 = arith.maximumf %54, %56 : vector<1x4xf32>
    %58 = vector.shape_cast %57 : vector<1x4xf32> to vector<1x1x4xf32>
    %c0_90 = arith.constant 0 : index
    %c11_91 = arith.constant 11 : index
    %c0_92 = arith.constant 0 : index
    %59 = vector.load %arg3[%c0_90, %c11_91, %c0_92] : memref<1x14x4xf32, #tpu.memory_space<vmem>>, vector<1x1x4xf32>
    tpu.vector_store %arg3[%c0_90, %c11_91, %c0_92], %58 {strides = array<i32>} : memref<1x14x4xf32, #tpu.memory_space<vmem>>, vector<1x1x4xf32>,
    %c0_93 = arith.constant 0 : index
    %c4_94 = arith.constant 4 : index
    %c0_95 = arith.constant 0 : index
    %60 = vector.load %arg3[%c0_93, %c4_94, %c0_95] : memref<1x14x4xf32, #tpu.memory_space<vmem>>, vector<1x2x4xf32>
    %cst_96 = arith.constant dense<0xFF800000> : vector<1x4xf32>
    %61 = vector.multi_reduction <maximumf>, %60, %cst_96 [1] : vector<1x2x4xf32> to vector<1x4xf32>
    %c0_97 = arith.constant 0 : index
    %c7_98 = arith.constant 7 : index
    %c0_99 = arith.constant 0 : index
    %62 = vector.load %arg3[%c0_97, %c7_98, %c0_99] : memref<1x14x4xf32, #tpu.memory_space<vmem>>, vector<1x2x4xf32>
    %cst_100 = arith.constant dense<0xFF800000> : vector<1x4xf32>
    %63 = vector.multi_reduction <maximumf>, %62, %cst_100 [1] : vector<1x2x4xf32> to vector<1x4xf32>
    %64 = arith.maximumf %61, %63 : vector<1x4xf32>
    %65 = vector.shape_cast %64 : vector<1x4xf32> to vector<1x1x4xf32>
    %c0_101 = arith.constant 0 : index
    %c12 = arith.constant 12 : index
    %c0_102 = arith.constant 0 : index
    %66 = vector.load %arg3[%c0_101, %c12, %c0_102] : memref<1x14x4xf32, #tpu.memory_space<vmem>>, vector<1x1x4xf32>
    tpu.vector_store %arg3[%c0_101, %c12, %c0_102], %65 {strides = array<i32>} : memref<1x14x4xf32, #tpu.memory_space<vmem>>, vector<1x1x4xf32>,
    %c0_103 = arith.constant 0 : index
    %c9_104 = arith.constant 9 : index
    %c0_105 = arith.constant 0 : index
    %67 = vector.load %arg3[%c0_103, %c9_104, %c0_105] : memref<1x14x4xf32, #tpu.memory_space<vmem>>, vector<1x2x4xf32>
    %cst_106 = arith.constant dense<0xFF800000> : vector<1x4xf32>
    %68 = vector.multi_reduction <maximumf>, %67, %cst_106 [1] : vector<1x2x4xf32> to vector<1x4xf32>
    %c0_107 = arith.constant 0 : index
    %c11_108 = arith.constant 11 : index
    %c0_109 = arith.constant 0 : index
    %69 = vector.load %arg3[%c0_107, %c11_108, %c0_109] : memref<1x14x4xf32, #tpu.memory_space<vmem>>, vector<1x2x4xf32>
    %cst_110 = arith.constant dense<0xFF800000> : vector<1x4xf32>
    %70 = vector.multi_reduction <maximumf>, %69, %cst_110 [1] : vector<1x2x4xf32> to vector<1x4xf32>
    %71 = arith.maximumf %68, %70 : vector<1x4xf32>
    %72 = vector.shape_cast %71 : vector<1x4xf32> to vector<1x1x4xf32>
    %c0_111 = arith.constant 0 : index
    %c13 = arith.constant 13 : index
    %c0_112 = arith.constant 0 : index
    %73 = vector.load %arg3[%c0_111, %c13, %c0_112] : memref<1x14x4xf32, #tpu.memory_space<vmem>>, vector<1x1x4xf32>
    tpu.vector_store %arg3[%c0_111, %c13, %c0_112], %72 {strides = array<i32>} : memref<1x14x4xf32, #tpu.memory_space<vmem>>, vector<1x1x4xf32>,
    return
  }
  func.func @transform_0(%arg0: i32, %arg1: i32) -> (i32, i32, i32, i32) {
    %c0_i32 = arith.constant 0 : i32
    %c0_i32_0 = arith.constant 0 : i32
    %c0_i32_1 = arith.constant 0 : i32
    return %arg0, %arg1, %c0_i32, %c0_i32_0 : i32, i32, i32, i32
  }
  func.func @transform_1(%arg0: i32, %arg1: i32) -> (i32, i32, i32) {
    %c0_i32 = arith.constant 0 : i32
    %c0_i32_0 = arith.constant 0 : i32
    return %arg0, %c0_i32, %arg1 : i32, i32, i32
  }
}

</mosaic_0001>

<llo_original>
// kernel: _lambda_.1
$region0: #{_lambda_.1}
  #allocation0 [shape = 'u32[]', space=smem, size = 0x4, offset = 0x4, fixed_abs, tag = 'smem constant byte address 0x4 - core index']
  #allocation1 [shape = 'u32[144,128]{1,0:T(1,128)}', space=vmem, size = 0x12000, scoped, tag = 'internal scratch']
  %s0 = inlined_call_operand.hbm [shape: f32[2,4,16,16], index: 0, kind: input, shape index: {}]
  %s1 = inlined_call_operand.vmem [shape: f32[2,14,4], index: 1, kind: output, shape index: {}]
  %s2 = sld [smem:[#allocation0]]
  $region41: #{_lambda_.1} parent=0
    _
  %s4 = ssub.s32 1, %s2
  %s5 = scalar_select 0, %s4, %s2
  $region1: #{_lambda_.1} parent=0
    #allocation2 [shape = 'u8[65536]{0}', space=vmem, size = 0x10000, scoped, tag = 'input window, operand 0']
    #allocation3 [shape = 's32[2]{0}', space=sflag, size = 0x8, scoped, tag = 'scoped memory for _lambda_.1']
    %6 = vsyncpa [#allocation3], 0
    %s7 = scalar_lea.sflag [#allocation3], 1
    %8 = vsyncpa %s7, 0
    loop: start=0, step=1, limit=4
    $region2: #{_lambda_.1} parent=1 // loop_pre_header
      _
    $region3: #{_lambda_.1} parent=1 // loop_header
      %s10 = sphi 0, %s14
      %p11 = scmp.ge.s32.totalorder %s10, 4
      %s17 = sphi 0, %s29
      %s18 = sphi 0, %s25
      %s19 = sphi 0, %s17
      %s20 = sphi 0, %s18
      %s21 = sphi 0, %s19
      %s22 = sphi 0, %s20
      %s34 = sphi 0, %s36
      %s37 = sphi 0, %s34
      %s38 = sphi 0, %s37
      %s54 = sphi 0, %s38
      %s62 = sphi 0, %s64
      %s65 = sphi 0, %s62
      %s66 = sphi 0, %s65
      %s82 = sphi 0, %s66
    $region4: #{_lambda_.1} parent=1 // loop_header_branch
      %13 = sbr.rel (%p11) target = $region8
    $region5: #{_lambda_.1} parent=1 // loop_body
      %s15 = ssub.s32 %s10, 1
      %s16 = ssub.s32 %s10, 2
      %s23 = sadd.s32 1, %s18
      %p24 = scmp.ge.s32.totalorder %s23, 1
      %s25 = scalar_select %p24, 0, %s23
      %s26 = sadd.s32 1, %s17
      %s27 = scalar_select %p24, %s26, %s17
      %p28 = scmp.ge.s32.totalorder %s27, 2
      %s29 = scalar_select %p28, 0, %s27
      %s30 = ssub.s32 %s17, %s29
      %s31 = ssub.s32 %s18, %s25
      %s32 = sor.u32 %s30, %s31
      %p33 = scmp.eq.s32.totalorder %s32, 0
      %s35 = sadd.s32 %s34, 1
      %s36 = scalar_select %p33, %s34, %s35
      %p39 = pneg %p33
      %p40 = scmp.eq.s32.totalorder %s10, 1
      %p41 = por %p39, %p40
      %p42 = scmp.ne.s32.totalorder %s34, %s37
      %p43 = scmp.eq.s32.totalorder %s10, 0
      %p44 = por %p42, %p43
      %p45 = scmp.ne.s32.totalorder %s34, %s37
      %p46 = scmp.eq.s32.totalorder %s15, 1
      %p47 = por %p45, %p46
      %p48 = scmp.ne.s32.totalorder %s37, %s38
      %p49 = scmp.eq.s32.totalorder %s15, 0
      %p50 = por %p48, %p49
      %p51 = scmp.ne.s32.totalorder %s37, %s38
      %p52 = scmp.eq.s32.totalorder %s16, 1
      %p53 = por %p51, %p52
      %p55 = scmp.ne.s32.totalorder %s38, %s54
      %p56 = scmp.eq.s32.totalorder %s16, 0
      %p57 = por %p55, %p56
      %s58 = ssub.s32 %s17, %s29
      %s59 = ssub.s32 %s18, %s25
      %s60 = sor.u32 %s58, %s59
      %p61 = scmp.eq.s32.totalorder %s60, 0
      %s63 = sadd.s32 %s62, 1
      %s64 = scalar_select %p61, %s62, %s63
      %p67 = pneg %p61
      %p68 = scmp.eq.s32.totalorder %s10, 1
      %p69 = por %p67, %p68
      %p70 = scmp.ne.s32.totalorder %s62, %s65
      %p71 = scmp.eq.s32.totalorder %s10, 0
      %p72 = por %p70, %p71
      %p73 = scmp.ne.s32.totalorder %s62, %s65
      %p74 = scmp.eq.s32.totalorder %s15, 1
      %p75 = por %p73, %p74
      %p76 = scmp.ne.s32.totalorder %s65, %s66
      %p77 = scmp.eq.s32.totalorder %s15, 0
      %p78 = por %p76, %p77
      %p79 = scmp.ne.s32.totalorder %s65, %s66
      %p80 = scmp.eq.s32.totalorder %s16, 1
      %p81 = por %p79, %p80
      %p83 = scmp.ne.s32.totalorder %s66, %s82
      %p84 = scmp.eq.s32.totalorder %s16, 0
      %p85 = por %p83, %p84
      %p86 = scmp.le.s32.totalorder 1, %s10
      %p87 = scmp.lt.s32.totalorder %s10, 3
      %p88 = pnand %p86, %p87
      %p89 = pneg %p88
      // Predicated region
      $region9: #{_lambda_.1} parent=5 // pred_check
        _
      $region10: #{_lambda_.1} parent=5 // pred_check_branch
        %91 = sbr.rel (%p88) target = $region12
      $region11: #{_lambda_.1} parent=5 // pred_region
        %s92 = ssub.s32 %s10, 1
      $region12: #{_lambda_.1} parent=5 // pred_fallthru
        _
      %p93 = scmp.lt.s32.totalorder %s10, 2
      // Predicated region
      $region13: #{_lambda_.1} parent=5 // pred_check
        %p94 = pneg %p93
      $region14: #{_lambda_.1} parent=5 // pred_check_branch
        %96 = sbr.rel (%p94) target = $region16
      $region15: #{_lambda_.1} parent=5 // pred_region
        // Predicated region
        $region17: #{_lambda_.1} parent=15 // pred_check
          %p97 = pneg %p44
        $region18: #{_lambda_.1} parent=15 // pred_check_branch
          %99 = sbr.rel (%p97) target = $region20
        $region19: #{_lambda_.1} parent=15 // pred_region
          %s100 = sand.u32 %s34, 1
          %s101 = scalar_lea.sflag [#allocation3], %s100
          %s102 = sand.u32 %s34, 1
          %s103 = smul.addr %s102, 64
          %s104 = scalar_lea.vmem [#allocation2], %s103
          %s105 = smul.u32 4, %s18
          %s107 = ssub.s32 1024, 1024
          %108 = vsyncadd %s101, %s107
          %s109 = smul.addr %s105, 2
          %s110 = smul.addr %s17, 8
          %s111 = sadd.s32 %s109, %s110
          %s112 = smul.addr %s111, 128
          %s113 = scalar_lea.hbm %s0, %s112
          %s114 = sshll.u32 %s104, 4
          %s115 = int_to_ptr.vmem [resolvable:$true] %s114
          %120 = dma.hbm_to_vmem [thread:$0]  %s113, 1024, %s115, %s101, 128, 128, 8
        $region20: #{_lambda_.1} parent=15 // pred_fallthru
          _
      $region16: #{_lambda_.1} parent=5 // pred_fallthru
        _
      %p121 = scmp.le.s32.totalorder 1, %s10
      %p122 = scmp.lt.s32.totalorder %s10, 3
      %p123 = pnand %p121, %p122
      %p124 = pneg %p123
      // Predicated region
      $region21: #{_lambda_.1} parent=5 // pred_check
        _
      $region22: #{_lambda_.1} parent=5 // pred_check_branch
        %126 = sbr.rel (%p123) target = $region24
      $region23: #{_lambda_.1} parent=5 // pred_region
        %s127 = ssub.s32 %s10, 1
        %s128 = sand.u32 %s37, 1
        %s129 = scalar_lea.sflag [#allocation3], %s128
        %s130 = sand.u32 %s37, 1
        %s131 = smul.addr %s130, 64
        %s132 = scalar_lea.vmem [#allocation2], %s131
        // Predicated region
        $region25: #{_lambda_.1} parent=23 // pred_check
          %p133 = pneg %p50
        $region26: #{_lambda_.1} parent=23 // pred_check_branch
          %135 = sbr.rel (%p133) target = $region28
        $region27: #{_lambda_.1} parent=23 // pred_region
          %136 = dma.done %s129, 1024
        $region28: #{_lambda_.1} parent=23 // pred_fallthru
          _
        %s137 = sand.u32 %s37, 1
        %s138 = scalar_lea.sflag [#allocation3], %s137
        %s139 = sand.u32 %s37, 1
        %s140 = smul.addr %s139, 64
        %s141 = scalar_lea.vmem [#allocation2], %s140
        %p142 = pneg %p50
        %p143 = pneg %p47
        %p144 = pneg %p78
        %p145 = pneg %p75
        %p146 = scmp.lt.s32.totalorder %s19, 1
        %s147 = scalar_select %p146, %s19, 1
        %p148 = scmp.lt.s32.totalorder %s20, 0
        %s149 = scalar_select %p148, %s20, 0
        %s150 = smul.addr %s147, 2
        %s151 = sadd.s32 %s149, %s150
        %s152 = smul.addr %s151, 8
        %s153 = scalar_lea.vmem %s1, %s152
        %s154 = smul.u32 4, %s20
        %p155 = scmp.lt.s32.totalorder %s19, 1
        %s156 = scalar_select %p155, %s19, 1
        %p157 = scmp.lt.s32.totalorder %s20, 0
        %s158 = scalar_select %p157, %s20, 0
        %s159 = smul.addr %s156, 2
        %s160 = sadd.s32 %s158, %s159
        %s161 = smul.addr %s160, 8
        %s162 = scalar_lea.vmem %s1, %s161
        %v163 = vld [vmem:[%s132] sm:$0x1f]
        %v164 = vld [vmem:[%s132 + $0x10] sm:$0x1f]
        %v165 = vld [vmem:[%s132 + $0x20] sm:$0x1f]
        %v166 = vld [vmem:[%s132 + $0x30] sm:$0x1f]
        %vm167 = vcmask 36864
        %v168 = vsel %vm167, %v163, -inf
        %169 = vmax.xlane.f32.xlu0 %v168
        %v170 = vpop.xlane.xlu0 %169
        %v171 = vsel %vm167, %v164, -inf
        %172 = vmax.xlane.f32.xlu0 %v171
        %v173 = vpop.xlane.xlu0 %172
        %v174 = vsel %vm167, %v165, -inf
        %175 = vmax.xlane.f32.xlu0 %v174
        %v176 = vpop.xlane.xlu0 %175
        %v177 = vsel %vm167, %v166, -inf
        %178 = vmax.xlane.f32.xlu0 %v177
        %v179 = vpop.xlane.xlu0 %178
        %v184 = vlaneseq
        %v185 = vand.u32 %v184, 127
        %v186 = vlaneseq
        %v187 = vshrl.u32 %v186, 7
        %v188 = vsub.s32 %v185, %v187
        %v189 = vrot.slane %v170, %v188
        %v190 = vlaneseq
        %v191 = vshrl.u32 %v190, 7
        %v192 = vsub.s32 %v185, %v191
        %v193 = vrot.slane %v173, %v192
        %v194 = vlaneseq
        %v195 = vshrl.u32 %v194, 7
        %v196 = vsub.s32 %v185, %v195
        %v197 = vrot.slane %v176, %v196
        %v198 = vlaneseq
        %v199 = vshrl.u32 %v198, 7
        %v200 = vsub.s32 %v185, %v199
        %v201 = vrot.slane %v179, %v200
        %vm202 = vcmask 1041409
        %v203 = vsel %vm202, %v193, %v189
        %vm204 = vcmask 1042434
        %v205 = vsel %vm204, %v197, %v203
        %vm206 = vcmask 1043459
        %v207 = vsel %vm206, %v201, %v205
        %vm209 = vcmask 35840
        %v210 = vsel %vm209, %v207, -inf
        %211 = vmax.xlane.f32.xlu0 %v210
        %v212 = vpop.xlane.xlu0 %211
        %v214 = vlaneseq
        %v215 = vshrl.u32 %v214, 7
        %v216 = vsub.s32 %v185, %v215
        %v217 = vrot.slane %v212, %v216
        %vm219 = vcmask 24576
        %220 = vst.msk [vmem:[%s162] sm:$0x1] %vm219, %v217
        %v221 = vld [vmem:[%s132] sm:$0x1f]
        %v222 = vld [vmem:[%s132 + $0x10] sm:$0x1f]
        %v223 = vld [vmem:[%s132 + $0x20] sm:$0x1f]
        %v224 = vld [vmem:[%s132 + $0x30] sm:$0x1f]
        %vm225 = vcmask 86056
        %v226 = vsel %vm225, %v221, -inf
        %227 = vmax.xlane.f32.xlu0 %v226
        %v228 = vpop.xlane.xlu0 %227
        %v229 = vsel %vm225, %v222, -inf
        %230 = vmax.xlane.f32.xlu0 %v229
        %v231 = vpop.xlane.xlu0 %230
        %v232 = vsel %vm225, %v223, -inf
        %233 = vmax.xlane.f32.xlu0 %v232
        %v234 = vpop.xlane.xlu0 %233
        %v235 = vsel %vm225, %v224, -inf
        %236 = vmax.xlane.f32.xlu0 %v235
        %v237 = vpop.xlane.xlu0 %236
        %v242 = vlaneseq
        %v243 = vshrl.u32 %v242, 7
        %v244 = vsub.s32 %v185, %v243
        %v245 = vrot.slane %v228, %v244
        %v246 = vlaneseq
        %v247 = vshrl.u32 %v246, 7
        %v248 = vsub.s32 %v185, %v247
        %v249 = vrot.slane %v231, %v248
        %v250 = vlaneseq
        %v251 = vshrl.u32 %v250, 7
        %v252 = vsub.s32 %v185, %v251
        %v253 = vrot.slane %v234, %v252
        %v254 = vlaneseq
        %v255 = vshrl.u32 %v254, 7
        %v256 = vsub.s32 %v185, %v255
        %v257 = vrot.slane %v237, %v256
        %v258 = vsel %vm202, %v249, %v245
        %v259 = vsel %vm204, %v253, %v258
        %v260 = vsel %vm206, %v257, %v259
        %v262 = vsel %vm209, %v260, -inf
        %263 = vmax.xlane.f32.xlu0 %v262
        %v264 = vpop.xlane.xlu0 %263
        %v266 = vlaneseq
        %v267 = vshrl.u32 %v266, 7
        %v268 = vsub.s32 %v185, %v267
        %v269 = vrot.slane %v264, %v268
        %271 = vst.msk [vmem:[%s162 + $0x1] sm:$0x1] %vm219, %v269
        %v272 = vld [vmem:[%s132] sm:$0x1f]
        %v273 = vld [vmem:[%s132 + $0x10] sm:$0x1f]
        %v274 = vld [vmem:[%s132 + $0x20] sm:$0x1f]
        %v275 = vld [vmem:[%s132 + $0x30] sm:$0x1f]
        %vm276 = vcmask 127064
        %v277 = vsel %vm276, %v272, -inf
        %278 = vmax.xlane.f32.xlu0 %v277
        %v279 = vpop.xlane.xlu0 %278
        %v280 = vsel %vm276, %v273, -inf
        %281 = vmax.xlane.f32.xlu0 %v280
        %v282 = vpop.xlane.xlu0 %281
        %v283 = vsel %vm276, %v274, -inf
        %284 = vmax.xlane.f32.xlu0 %v283
        %v285 = vpop.xlane.xlu0 %284
        %v286 = vsel %vm276, %v275, -inf
        %287 = vmax.xlane.f32.xlu0 %v286
        %v288 = vpop.xlane.xlu0 %287
        %v293 = vlaneseq
        %v294 = vshrl.u32 %v293, 7
        %v295 = vsub.s32 %v185, %v294
        %v296 = vrot.slane %v279, %v295
        %v297 = vlaneseq
        %v298 = vshrl.u32 %v297, 7
        %v299 = vsub.s32 %v185, %v298
        %v300 = vrot.slane %v282, %v299
        %v301 = vlaneseq
        %v302 = vshrl.u32 %v301, 7
        %v303 = vsub.s32 %v185, %v302
        %v304 = vrot.slane %v285, %v303
        %v305 = vlaneseq
        %v306 = vshrl.u32 %v305, 7
        %v307 = vsub.s32 %v185, %v306
        %v308 = vrot.slane %v288, %v307
        %v309 = vsel %vm202, %v300, %v296
        %v310 = vsel %vm204, %v304, %v309
        %v311 = vsel %vm206, %v308, %v310
        %v313 = vsel %vm209, %v311, -inf
        %314 = vmax.xlane.f32.xlu0 %v313
        %v315 = vpop.xlane.xlu0 %314
        %v317 = vlaneseq
        %v318 = vshrl.u32 %v317, 7
        %v319 = vsub.s32 %v185, %v318
        %v320 = vrot.slane %v315, %v319
        %322 = vst.msk [vmem:[%s162 + $0x2] sm:$0x1] %vm219, %v320
        %v323 = vld [vmem:[%s132 + $0x5] sm:$0x3f]
        %v324 = vld [vmem:[%s132 + $0x15] sm:$0x3f]
        %v325 = vld [vmem:[%s132 + $0x25] sm:$0x3f]
        %v326 = vld [vmem:[%s132 + $0x35] sm:$0x3f]
        %vm327 = vcmask 37888
        %v328 = vsel %vm327, %v323, -inf
        %329 = vmax.xlane.f32.xlu0 %v328
        %v330 = vpop.xlane.xlu0 %329
        %v331 = vsel %vm327, %v324, -inf
        %332 = vmax.xlane.f32.xlu0 %v331
        %v333 = vpop.xlane.xlu0 %332
        %v334 = vsel %vm327, %v325, -inf
        %335 = vmax.xlane.f32.xlu0 %v334
        %v336 = vpop.xlane.xlu0 %335
        %v337 = vsel %vm327, %v326, -inf
        %338 = vmax.xlane.f32.xlu0 %v337
        %v339 = vpop.xlane.xlu0 %338
        %v344 = vlaneseq
        %v345 = vshrl.u32 %v344, 7
        %v346 = vsub.s32 %v185, %v345
        %v347 = vrot.slane %v330, %v346
        %v348 = vlaneseq
        %v349 = vshrl.u32 %v348, 7
        %v350 = vsub.s32 %v185, %v349
        %v351 = vrot.slane %v333, %v350
        %v352 = vlaneseq
        %v353 = vshrl.u32 %v352, 7
        %v354 = vsub.s32 %v185, %v353
        %v355 = vrot.slane %v336, %v354
        %v356 = vlaneseq
        %v357 = vshrl.u32 %v356, 7
        %v358 = vsub.s32 %v185, %v357
        %v359 = vrot.slane %v339, %v358
        %v360 = vsel %vm202, %v351, %v347
        %v361 = vsel %vm204, %v355, %v360
        %v362 = vsel %vm206, %v359, %v361
        %vm364 = vcmask 44032
        %v365 = vsel %vm364, %v362, -inf
        %366 = vmax.xlane.f32.xlu0 %v365
        %v367 = vpop.xlane.xlu0 %366
        %v369 = vlaneseq
        %v370 = vshrl.u32 %v369, 7
        %v371 = vsub.s32 %v185, %v370
        %v372 = vrot.slane %v367, %v371
        %374 = vst.msk [vmem:[%s162 + $0x3] sm:$0x1] %vm219, %v372
        %v375 = vld [vmem:[%s132 + $0x5] sm:$0x3f]
        %v376 = vld [vmem:[%s132 + $0x15] sm:$0x3f]
        %v377 = vld [vmem:[%s132 + $0x25] sm:$0x3f]
        %v378 = vld [vmem:[%s132 + $0x35] sm:$0x3f]
        %vm379 = vcmask 87080
        %v380 = vsel %vm379, %v375, -inf
        %381 = vmax.xlane.f32.xlu0 %v380
        %v382 = vpop.xlane.xlu0 %381
        %v383 = vsel %vm379, %v376, -inf
        %384 = vmax.xlane.f32.xlu0 %v383
        %v385 = vpop.xlane.xlu0 %384
        %v386 = vsel %vm379, %v377, -inf
        %387 = vmax.xlane.f32.xlu0 %v386
        %v388 = vpop.xlane.xlu0 %387
        %v389 = vsel %vm379, %v378, -inf
        %390 = vmax.xlane.f32.xlu0 %v389
        %v391 = vpop.xlane.xlu0 %390
        %v396 = vlaneseq
        %v397 = vshrl.u32 %v396, 7
        %v398 = vsub.s32 %v185, %v397
        %v399 = vrot.slane %v382, %v398
        %v400 = vlaneseq
        %v401 = vshrl.u32 %v400, 7
        %v402 = vsub.s32 %v185, %v401
        %v403 = vrot.slane %v385, %v402
        %v404 = vlaneseq
        %v405 = vshrl.u32 %v404, 7
        %v406 = vsub.s32 %v185, %v405
        %v407 = vrot.slane %v388, %v406
        %v408 = vlaneseq
        %v409 = vshrl.u32 %v408, 7
        %v410 = vsub.s32 %v185, %v409
        %v411 = vrot.slane %v391, %v410
        %v412 = vsel %vm202, %v403, %v399
        %v413 = vsel %vm204, %v407, %v412
        %v414 = vsel %vm206, %v411, %v413
        %v416 = vsel %vm364, %v414, -inf
        %417 = vmax.xlane.f32.xlu0 %v416
        %v418 = vpop.xlane.xlu0 %417
        %v420 = vlaneseq
        %v421 = vshrl.u32 %v420, 7
        %v422 = vsub.s32 %v185, %v421
        %v423 = vrot.slane %v418, %v422
        %425 = vst.msk [vmem:[%s162 + $0x4] sm:$0x1] %vm219, %v423
        %v426 = vld [vmem:[%s132 + $0x5] sm:$0x3f]
        %v427 = vld [vmem:[%s132 + $0x15] sm:$0x3f]
        %v428 = vld [vmem:[%s132 + $0x25] sm:$0x3f]
        %v429 = vld [vmem:[%s132 + $0x35] sm:$0x3f]
        %vm430 = vcmask 128088
        %v431 = vsel %vm430, %v426, -inf
        %432 = vmax.xlane.f32.xlu0 %v431
        %v433 = vpop.xlane.xlu0 %432
        %v434 = vsel %vm430, %v427, -inf
        %435 = vmax.xlane.f32.xlu0 %v434
        %v436 = vpop.xlane.xlu0 %435
        %v437 = vsel %vm430, %v428, -inf
        %438 = vmax.xlane.f32.xlu0 %v437
        %v439 = vpop.xlane.xlu0 %438
        %v440 = vsel %vm430, %v429, -inf
        %441 = vmax.xlane.f32.xlu0 %v440
        %v442 = vpop.xlane.xlu0 %441
        %v447 = vlaneseq
        %v448 = vshrl.u32 %v447, 7
        %v449 = vsub.s32 %v185, %v448
        %v450 = vrot.slane %v433, %v449
        %v451 = vlaneseq
        %v452 = vshrl.u32 %v451, 7
        %v453 = vsub.s32 %v185, %v452
        %v454 = vrot.slane %v436, %v453
        %v455 = vlaneseq
        %v456 = vshrl.u32 %v455, 7
        %v457 = vsub.s32 %v185, %v456
        %v458 = vrot.slane %v439, %v457
        %v459 = vlaneseq
        %v460 = vshrl.u32 %v459, 7
        %v461 = vsub.s32 %v185, %v460
        %v462 = vrot.slane %v442, %v461
        %v463 = vsel %vm202, %v454, %v450
        %v464 = vsel %vm204, %v458, %v463
        %v465 = vsel %vm206, %v462, %v464
        %v467 = vsel %vm364, %v465, -inf
        %468 = vmax.xlane.f32.xlu0 %v467
        %v469 = vpop.xlane.xlu0 %468
        %v471 = vlaneseq
        %v472 = vshrl.u32 %v471, 7
        %v473 = vsub.s32 %v185, %v472
        %v474 = vrot.slane %v469, %v473
        %476 = vst.msk [vmem:[%s162 + $0x5] sm:$0x1] %vm219, %v474
        %v477 = vld [vmem:[%s132 + $0xb] sm:$0x1f]
        %v478 = vld [vmem:[%s132 + $0x1b] sm:$0x1f]
        %v479 = vld [vmem:[%s132 + $0x2b] sm:$0x1f]
        %v480 = vld [vmem:[%s132 + $0x3b] sm:$0x1f]
        %v481 = vsel %vm167, %v477, -inf
        %482 = vmax.xlane.f32.xlu0 %v481
        %v483 = vpop.xlane.xlu0 %482
        %v484 = vsel %vm167, %v478, -inf
        %485 = vmax.xlane.f32.xlu0 %v484
        %v486 = vpop.xlane.xlu0 %485
        %v487 = vsel %vm167, %v479, -inf
        %488 = vmax.xlane.f32.xlu0 %v487
        %v489 = vpop.xlane.xlu0 %488
        %v490 = vsel %vm167, %v480, -inf
        %491 = vmax.xlane.f32.xlu0 %v490
        %v492 = vpop.xlane.xlu0 %491
        %v497 = vlaneseq
        %v498 = vshrl.u32 %v497, 7
        %v499 = vsub.s32 %v185, %v498
        %v500 = vrot.slane %v483, %v499
        %v501 = vlaneseq
        %v502 = vshrl.u32 %v501, 7
        %v503 = vsub.s32 %v185, %v502
        %v504 = vrot.slane %v486, %v503
        %v505 = vlaneseq
        %v506 = vshrl.u32 %v505, 7
        %v507 = vsub.s32 %v185, %v506
        %v508 = vrot.slane %v489, %v507
        %v509 = vlaneseq
        %v510 = vshrl.u32 %v509, 7
        %v511 = vsub.s32 %v185, %v510
        %v512 = vrot.slane %v492, %v511
        %v513 = vsel %vm202, %v504, %v500
        %v514 = vsel %vm204, %v508, %v513
        %v515 = vsel %vm206, %v512, %v514
        %v517 = vsel %vm209, %v515, -inf
        %518 = vmax.xlane.f32.xlu0 %v517
        %v519 = vpop.xlane.xlu0 %518
        %v521 = vlaneseq
        %v522 = vshrl.u32 %v521, 7
        %v523 = vsub.s32 %v185, %v522
        %v524 = vrot.slane %v519, %v523
        %526 = vst.msk [vmem:[%s162 + $0x6] sm:$0x1] %vm219, %v524
        %v527 = vld [vmem:[%s132 + $0xb] sm:$0x1f]
        %v528 = vld [vmem:[%s132 + $0x1b] sm:$0x1f]
        %v529 = vld [vmem:[%s132 + $0x2b] sm:$0x1f]
        %v530 = vld [vmem:[%s132 + $0x3b] sm:$0x1f]
        %v531 = vsel %vm225, %v527, -inf
        %532 = vmax.xlane.f32.xlu0 %v531
        %v533 = vpop.xlane.xlu0 %532
        %v534 = vsel %vm225, %v528, -inf
        %535 = vmax.xlane.f32.xlu0 %v534
        %v536 = vpop.xlane.xlu0 %535
        %v537 = vsel %vm225, %v529, -inf
        %538 = vmax.xlane.f32.xlu0 %v537
        %v539 = vpop.xlane.xlu0 %538
        %v540 = vsel %vm225, %v530, -inf
        %541 = vmax.xlane.f32.xlu0 %v540
        %v542 = vpop.xlane.xlu0 %541
        %v547 = vlaneseq
        %v548 = vshrl.u32 %v547, 7
        %v549 = vsub.s32 %v185, %v548
        %v550 = vrot.slane %v533, %v549
        %v551 = vlaneseq
        %v552 = vshrl.u32 %v551, 7
        %v553 = vsub.s32 %v185, %v552
        %v554 = vrot.slane %v536, %v553
        %v555 = vlaneseq
        %v556 = vshrl.u32 %v555, 7
        %v557 = vsub.s32 %v185, %v556
        %v558 = vrot.slane %v539, %v557
        %v559 = vlaneseq
        %v560 = vshrl.u32 %v559, 7
        %v561 = vsub.s32 %v185, %v560
        %v562 = vrot.slane %v542, %v561
        %v563 = vsel %vm202, %v554, %v550
        %v564 = vsel %vm204, %v558, %v563
        %v565 = vsel %vm206, %v562, %v564
        %v567 = vsel %vm209, %v565, -inf
        %568 = vmax.xlane.f32.xlu0 %v567
        %v569 = vpop.xlane.xlu0 %568
        %v571 = vlaneseq
        %v572 = vshrl.u32 %v571, 7
        %v573 = vsub.s32 %v185, %v572
        %v574 = vrot.slane %v569, %v573
        %576 = vst.msk [vmem:[%s162 + $0x7] sm:$0x1] %vm219, %v574
        %v577 = vld [vmem:[%s132 + $0xb] sm:$0x1f]
        %v578 = vld [vmem:[%s132 + $0x1b] sm:$0x1f]
        %v579 = vld [vmem:[%s132 + $0x2b] sm:$0x1f]
        %v580 = vld [vmem:[%s132 + $0x3b] sm:$0x1f]
        %v581 = vsel %vm276, %v577, -inf
        %582 = vmax.xlane.f32.xlu0 %v581
        %v583 = vpop.xlane.xlu0 %582
        %v584 = vsel %vm276, %v578, -inf
        %585 = vmax.xlane.f32.xlu0 %v584
        %v586 = vpop.xlane.xlu0 %585
        %v587 = vsel %vm276, %v579, -inf
        %588 = vmax.xlane.f32.xlu0 %v587
        %v589 = vpop.xlane.xlu0 %588
        %v590 = vsel %vm276, %v580, -inf
        %591 = vmax.xlane.f32.xlu0 %v590
        %v592 = vpop.xlane.xlu0 %591
        %v597 = vlaneseq
        %v598 = vshrl.u32 %v597, 7
        %v599 = vsub.s32 %v185, %v598
        %v600 = vrot.slane %v583, %v599
        %v601 = vlaneseq
        %v602 = vshrl.u32 %v601, 7
        %v603 = vsub.s32 %v185, %v602
        %v604 = vrot.slane %v586, %v603
        %v605 = vlaneseq
        %v606 = vshrl.u32 %v605, 7
        %v607 = vsub.s32 %v185, %v606
        %v608 = vrot.slane %v589, %v607
        %v609 = vlaneseq
        %v610 = vshrl.u32 %v609, 7
        %v611 = vsub.s32 %v185, %v610
        %v612 = vrot.slane %v592, %v611
        %v613 = vsel %vm202, %v604, %v600
        %v614 = vsel %vm204, %v608, %v613
        %v615 = vsel %vm206, %v612, %v614
        %v617 = vsel %vm209, %v615, -inf
        %618 = vmax.xlane.f32.xlu0 %v617
        %v619 = vpop.xlane.xlu0 %618
        %v621 = vlaneseq
        %v622 = vshrl.u32 %v621, 7
        %v623 = vsub.s32 %v185, %v622
        %v624 = vrot.slane %v619, %v623
        %626 = vst.msk [vmem:[%s162 + $0x8] sm:$0x1] %vm219, %v624
        %v627 = vld [vmem:[%s162] sm:$0x1]
        %628 = vst.msk [vmem:[%s162 + $0x9] sm:$0x1] %vm219, %v627
        %v629 = vld [vmem:[%s162 + $0x1] sm:$0x3]
        %vm630 = vcmask 25600
        %v631 = vsel %vm630, %v629, -inf
        %v632 = vrot.slane %v631, 4
        %v633 = vmax.f32 %v631, %v632
        %v634 = vrot.slane %v633, 2
        %v635 = vmax.f32 %v633, %v634
        %v636 = vrot.slane %v635, 1
        %v637 = vmax.f32 %v635, %v636
        %638 = vst.msk [vmem:[%s162 + $0xa] sm:$0x1] %vm219, %v637
        %v639 = vld [vmem:[%s162 + $0x3] sm:$0x1]
        %v640 = vld [vmem:[%s162 + $0x6] sm:$0x1]
        %v641 = vmax.f32 %v639, %v640
        %642 = vst.msk [vmem:[%s162 + $0xb] sm:$0x1] %vm219, %v641
        %v643 = vld [vmem:[%s162 + $0x4] sm:$0x3]
        %v644 = vsel %vm630, %v643, -inf
        %v645 = vrot.slane %v644, 4
        %v646 = vmax.f32 %v644, %v645
        %v647 = vrot.slane %v646, 2
        %v648 = vmax.f32 %v646, %v647
        %v649 = vrot.slane %v648, 1
        %v650 = vmax.f32 %v648, %v649
        %v651 = vld [vmem:[%s162 + $0x7] sm:$0x3]
        %v652 = vsel %vm630, %v651, -inf
        %v653 = vrot.slane %v652, 4
        %v654 = vmax.f32 %v652, %v653
        %v655 = vrot.slane %v654, 2
        %v656 = vmax.f32 %v654, %v655
        %v657 = vrot.slane %v656, 1
        %v658 = vmax.f32 %v656, %v657
        %v659 = vmax.f32 %v650, %v658
        %660 = vst.msk [vmem:[%s162 + $0xc] sm:$0x1] %vm219, %v659
        %v661 = vld [vmem:[%s162 + $0x9] sm:$0x3]
        %v662 = vsel %vm630, %v661, -inf
        %v663 = vrot.slane %v662, 4
        %v664 = vmax.f32 %v662, %v663
        %v665 = vrot.slane %v664, 2
        %v666 = vmax.f32 %v664, %v665
        %v667 = vrot.slane %v666, 1
        %v668 = vmax.f32 %v666, %v667
        %v669 = vld [vmem:[%s162 + $0xb] sm:$0x3]
        %v670 = vsel %vm630, %v669, -inf
        %v671 = vrot.slane %v670, 4
        %v672 = vmax.f32 %v670, %v671
        %v673 = vrot.slane %v672, 2
        %v674 = vmax.f32 %v672, %v673
        %v675 = vrot.slane %v674, 1
        %v676 = vmax.f32 %v674, %v675
        %v677 = vmax.f32 %v668, %v676
        %678 = vst.msk [vmem:[%s162 + $0xd] sm:$0x1] %vm219, %v677
        %p679 = scmp.lt.s32.totalorder %s19, 1
        %s680 = scalar_select %p679, %s19, 1
        %p681 = scmp.lt.s32.totalorder %s20, 0
        %s682 = scalar_select %p681, %s20, 0
        %s683 = smul.addr %s680, 2
        %s684 = sadd.s32 %s682, %s683
        %s685 = smul.addr %s684, 8
        %s686 = scalar_lea.vmem %s1, %s685
        // Predicated region
        $region29: #{_lambda_.1} parent=23 // pred_check
          %p687 = pneg %p75
        $region30: #{_lambda_.1} parent=23 // pred_check_branch
          %689 = sbr.rel (%p687) target = $region32
        $region31: #{_lambda_.1} parent=23 // pred_region
          _
        $region32: #{_lambda_.1} parent=23 // pred_fallthru
          _
      $region24: #{_lambda_.1} parent=5 // pred_fallthru
        _
      %p690 = scmp.le.s32.totalorder 2, %s10
      // Predicated region
      $region33: #{_lambda_.1} parent=5 // pred_check
        %p691 = pneg %p690
      $region34: #{_lambda_.1} parent=5 // pred_check_branch
        %693 = sbr.rel (%p691) target = $region36
      $region35: #{_lambda_.1} parent=5 // pred_region
        %s694 = ssub.s32 %s10, 2
        // Predicated region
        $region37: #{_lambda_.1} parent=35 // pred_check
          %p695 = pneg %p81
        $region38: #{_lambda_.1} parent=35 // pred_check_branch
          %697 = sbr.rel (%p695) target = $region40
        $region39: #{_lambda_.1} parent=35 // pred_region
          %p698 = scmp.lt.s32.totalorder %s21, 1
          %s699 = scalar_select %p698, %s21, 1
          %p700 = scmp.lt.s32.totalorder %s22, 0
          %s701 = scalar_select %p700, %s22, 0
          %s702 = smul.addr %s699, 2
          %s703 = sadd.s32 %s701, %s702
          %s704 = smul.addr %s703, 8
          %s705 = scalar_lea.vmem %s1, %s704
        $region40: #{_lambda_.1} parent=35 // pred_fallthru
          _
      $region36: #{_lambda_.1} parent=5 // pred_fallthru
        _
    $region6: #{_lambda_.1} parent=1 // loop_footer
      %s14 = sadd.s32 1, %s10
    $region7: #{_lambda_.1} parent=1 // loop_footer_branch
      %9 = sbr.rel target = $region3
    $region8: #{_lambda_.1} parent=1 // loop_exit
      _
    %706 = vsyncpa [#allocation3], 1
    %s707 = scalar_lea.sflag [#allocation3], 1
    %708 = vsyncpa %s707, 1

</llo_original>
